<compile_context>
chip_gen: v7x
topology: tpu7x:2x2x1
jax: 0.10.0
libtpu: 0.0.40
codegen_flags: <defaults>
</compile_context>

<pallas_src>
import functools

import jax
import jax.numpy as jnp
from jax.experimental import pallas as pl
from jax.experimental.pallas import tpu as pltpu

SELU_ALPHA = 1.6732632423543772
SELU_SCALE = 1.0507009873554805

_MAX_BLOCK_M = 512      # rows per tile cap (VMEM-bounded, gives pipeline depth at scale)
_FOLD_H_MAX_C = 128     # fold mean-over-H into the weight only while C < MXU width


def final_projection_kernel(x_ref, w_ref, b_ref, o_ref):
    # x_ref: (TM, K) f32 activation rows (rows are (b, w) pairs)
    # w_ref: (K, O)  bf16 weight (transpose [+ H-mean fold] pre-applied)
    # b_ref: (1, O)  f32 bias
    # o_ref: (TM, O) output rows
    x = x_ref[...].astype(jnp.bfloat16)                               # MXU-native operand
    y = jnp.dot(x, w_ref[...], preferred_element_type=jnp.float32)    # (TM, O), f32 accum
    y = y + b_ref[...]                                                # single f32 bias add
    # SELU in f32 (exp goes to the otherwise-idle EUP slot)
    y = SELU_SCALE * jnp.where(y > 0, y, SELU_ALPHA * (jnp.exp(y) - 1.0))
    # TODO(synk): nn.Dropout is identity in eval mode; training-mode dropout not implemented.
    o_ref[...] = y.astype(o_ref.dtype)


def prepare_params(weight, bias, H):
    """One-time parameter prep (call at load time, NOT every forward).

    weight: (O, C) PyTorch Linear layout; bias: (O,).
    Returns (w_prepped [K, O] bf16, bias [1, O] f32, fold_h flag)."""
    O, C = weight.shape
    fold_h = C < _FOLD_H_MAX_C
    if fold_h:
        # Row (c*H + h) of w = weight[:, c] / H -> matches row-major (c, h) flattening
        # of x.reshape(B, C*H, W); the matmul then computes the H-mean for free.
        w = jnp.repeat(weight.T / H, H, axis=0)          # (C*H, O)
    else:
        # Large C: don't inflate K by 8x; the H-mean is done outside the kernel.
        w = weight.T                                      # (C, O)
    return w.astype(jnp.bfloat16), bias.reshape(1, O).astype(jnp.float32), fold_h


def _pick_block_m(M, max_rows=_MAX_BLOCK_M):
    """8-aligned row-tile <= max_rows; full M when small (single step, no overhead)."""
    if M <= max_rows:
        return M
    top = max_rows - (max_rows % 8)
    for bm in range(top, 7, -8):          # prefer an exact divisor of M
        if M % bm == 0:
            return bm
    return top                            # fall back to cdiv grid with a ragged tail


def _const_spec(shape):
    """BlockSpec for a grid-invariant operand; single-buffered when supported."""
    index_map = lambda i: (0,) * len(shape)
    try:
        return pl.BlockSpec(shape, index_map, pipeline_mode=pl.Buffered(1))
    except TypeError:  # older Pallas without pipeline_mode: default double-buffering
        return pl.BlockSpec(shape, index_map)


@functools.partial(jax.jit, static_argnames=("fold_h",))
def final_projection(x, w_prepped, b2, fold_h=True):
    """x: (B, C, H, W) f32; w_prepped/b2 from prepare_params. Returns (B, W, O)."""
    B, C, H, W = x.shape
    K, O = w_prepped.shape
    M = B * W

    # Layout plumbing (wrapper side, cheap XLA ops): one lane-dense (M, K) LHS.
    if fold_h:
        x_flat = jnp.transpose(x.reshape(B, C * H, W), (0, 2, 1)).reshape(M, K)
    else:
        x_flat = jnp.transpose(jnp.mean(x, axis=-2), (0, 2, 1)).reshape(M, K)

    block_m = _pick_block_m(M)
    grid_m = pl.cdiv(M, block_m)

    cost = pl.CostEstimate(
        flops=2 * M * K * O,
        transcendentals=M * O,                                   # exp in SELU
        bytes_accessed=M * K * 4 + K * O * 2 + O * 4 + M * O * 4,
    )

    out = pl.pallas_call(
        final_projection_kernel,
        out_shape=jax.ShapeDtypeStruct((M, O), x.dtype),
        grid_spec=pltpu.PrefetchScalarGridSpec(
            num_scalar_prefetch=0,
            grid=(grid_m,),
            in_specs=[
                pl.BlockSpec((block_m, K), lambda i: (i, 0)),
                _const_spec((K, O)),      # weight: fetched once, single-buffered
                _const_spec((1, O)),      # bias:   fetched once, single-buffered
            ],
            out_specs=pl.BlockSpec((block_m, O), lambda i: (i, 0)),
        ),
        compiler_params=pltpu.CompilerParams(
            dimension_semantics=("parallel",),
        ),
        cost_estimate=cost,
    )(x_flat, w_prepped, b2)

    return out.reshape(B, W, O)


def final_projection_ref(x, weight, bias):
    """Pure-JAX f32 reference matching the PyTorch forward (eval mode)."""
    xm = jnp.mean(x, axis=-2)                       # (B, C, W)
    xb = jnp.transpose(xm, (0, 2, 1))               # (B, W, C)
    y = xb @ weight.T + bias                        # (B, W, O)
    return SELU_SCALE * jnp.where(y > 0, y, SELU_ALPHA * (jnp.exp(y) - 1.0))


if __name__ == "__main__":
    key = jax.random.PRNGKey(0)
    kx, kw, kb = jax.random.split(key, 3)

    B, C, H, W = 2, 32, 8, 16          # in_channels = C
    O = 64                             # out_channels

    x = jax.random.normal(kx, (B, C, H, W), dtype=jnp.float32)
    # PyTorch Linear parameter shapes: weight (O, C), bias (O,)
    weight = jax.random.normal(kw, (O, C), dtype=jnp.float32) * 0.05
    bias = jax.random.normal(kb, (O,), dtype=jnp.float32) * 0.05

    # Parameter prep hoisted out of the per-call path (run once at load time).
    w_prepped, b2, fold_h = prepare_params(weight, bias, H)

    out = final_projection(x, w_prepped, b2, fold_h=fold_h)
    out = jax.block_until_ready(out)

    ref = final_projection_ref(x, weight, bias)
    assert out.shape == (B, W, O), out.shape
    # Tolerance reflects bf16 matmul operands (f32 accumulation); error is O(1e-3) here.
    assert jnp.allclose(out, ref, atol=1e-2, rtol=1e-2), "mismatch vs reference"

    print("KERNEL_OK")
</pallas_src>

<mosaic_0001>
module attributes {stable_mosaic.version = 11 : i64} {
  func.func @final_projection_kernel(%arg0: i32, %arg1: memref<32x256xf32, #tpu.memory_space<vmem>>, %arg2: memref<256x64xbf16, #tpu.memory_space<vmem>>, %arg3: memref<1x64xf32, #tpu.memory_space<vmem>>, %arg4: memref<32x64xf32, #tpu.memory_space<vmem>>) attributes {dimension_semantics = [#tpu.dimension_semantics<parallel>], iteration_bounds = array<i64: 1>, scalar_prefetch = 0 : i64, scratch_operands = 0 : i64, tpu.core_type = #tpu.core_type<tc>, window_params = [{transform_indices = @transform_0, window_bounds = array<i64: 32, 256>}, {pipeline_mode = #tpu.pipeline_mode<synchronous>, transform_indices = @transform_1, window_bounds = array<i64: 256, 64>}, {pipeline_mode = #tpu.pipeline_mode<synchronous>, transform_indices = @transform_2, window_bounds = array<i64: 1, 64>}, {transform_indices = @transform_3, window_bounds = array<i64: 32, 64>}]} {
    %c0 = arith.constant 0 : index
    %c0_0 = arith.constant 0 : index
    %0 = vector.load %arg1[%c0, %c0_0] : memref<32x256xf32, #tpu.memory_space<vmem>>, vector<32x256xf32>
    %1 = arith.truncf %0 : vector<32x256xf32> to vector<32x256xbf16>
    %c0_1 = arith.constant 0 : index
    %c0_2 = arith.constant 0 : index
    %2 = vector.load %arg2[%c0_1, %c0_2] : memref<256x64xbf16, #tpu.memory_space<vmem>>, vector<256x64xbf16>
    %cst = arith.constant dense<0.000000e+00> : vector<32x64xf32>
    %3 = tpu.matmul %1, %2, %cst {dimension_numbers = #tpu.dot_dimension_numbers<[1], [0], [0], [1], [0, 0, 1, 1], [], []>} : vector<32x256xbf16>, vector<256x64xbf16>, vector<32x64xf32> -> vector<32x64xf32>
    %c0_3 = arith.constant 0 : index
    %c0_4 = arith.constant 0 : index
    %4 = vector.load %arg3[%c0_3, %c0_4] : memref<1x64xf32, #tpu.memory_space<vmem>>, vector<1x64xf32>
    %5 = vector.broadcast %4 : vector<1x64xf32> to vector<32x64xf32>
    %6 = arith.addf %3, %5 : vector<32x64xf32>
    %cst_5 = arith.constant 0.000000e+00 : f32
    %7 = vector.broadcast %cst_5 : f32 to vector<32x64xf32>
    %8 = arith.cmpf ogt, %6, %7 : vector<32x64xf32>
    %9 = math.exp %6 : vector<32x64xf32>
    %cst_6 = arith.constant 1.000000e+00 : f32
    %10 = vector.broadcast %cst_6 : f32 to vector<32x64xf32>
    %11 = arith.subf %9, %10 : vector<32x64xf32>
    %cst_7 = arith.constant 1.67326319 : f32
    %12 = vector.broadcast %cst_7 : f32 to vector<32x64xf32>
    %13 = arith.mulf %12, %11 : vector<32x64xf32>
    %14 = arith.select %8, %6, %13 : vector<32x64xi1>, vector<32x64xf32>
    %cst_8 = arith.constant 1.05070102 : f32
    %15 = vector.broadcast %cst_8 : f32 to vector<32x64xf32>
    %16 = arith.mulf %15, %14 : vector<32x64xf32>
    %c0_9 = arith.constant 0 : index
    %c0_10 = arith.constant 0 : index
    %17 = vector.load %arg4[%c0_9, %c0_10] : memref<32x64xf32, #tpu.memory_space<vmem>>, vector<32x64xf32>
    tpu.vector_store %arg4[%c0_9, %c0_10], %16 {strides = array<i32>} : memref<32x64xf32, #tpu.memory_space<vmem>>, vector<32x64xf32>,
    return
  }
  func.func @transform_0(%arg0: i32) -> (i32, i32) {
    %c0_i32 = arith.constant 0 : i32
    %c0_i32_0 = arith.constant 0 : i32
    return %arg0, %c0_i32 : i32, i32
  }
  func.func @transform_1(%arg0: i32) -> (i32, i32) {
    %c0_i32 = arith.constant 0 : i32
    %c0_i32_0 = arith.constant 0 : i32
    %c0_i32_1 = arith.constant 0 : i32
    return %c0_i32, %c0_i32_0 : i32, i32
  }
  func.func @transform_2(%arg0: i32) -> (i32, i32) {
    %c0_i32 = arith.constant 0 : i32
    %c0_i32_0 = arith.constant 0 : i32
    %c0_i32_1 = arith.constant 0 : i32
    return %c0_i32, %c0_i32_0 : i32, i32
  }
  func.func @transform_3(%arg0: i32) -> (i32, i32) {
    %c0_i32 = arith.constant 0 : i32
    %c0_i32_0 = arith.constant 0 : i32
    return %arg0, %c0_i32 : i32, i32
  }
}

</mosaic_0001>

<llo_original>
// kernel: final_projection.1
$region0: #{final_projection.1}
  #allocation0 [shape = 'u32[]', space=smem, size = 0x4, offset = 0x4, fixed_abs, tag = 'smem constant byte address 0x4 - core index']
  #allocation1 [shape = 'u32[144,128]{1,0:T(1,128)}', space=vmem, size = 0x12000, scoped, tag = 'internal scratch']
  %s0 = inlined_call_operand.vmem [shape: f32[32,256], index: 0, kind: input, shape index: {}]
  %s1 = inlined_call_operand.vmem [shape: bf16[256,64], index: 1, kind: input, shape index: {}]
  %s2 = inlined_call_operand.vmem [shape: f32[1,64], index: 2, kind: input, shape index: {}]
  %s3 = inlined_call_operand.hbm [shape: f32[32,64], index: 3, kind: output, shape index: {}]
  %s4 = sld [smem:[#allocation0]]
  $region22: #{final_projection.1} parent=0
    _
  %s6 = ssub.s32 1, %s4
  %s7 = scalar_select 0, %s6, %s4
  $region1: #{final_projection.1} parent=0
    #allocation2 [shape = 'u8[16384]{0}', space=vmem, size = 0x4000, scoped, tag = 'output window, operand 0, single buffered']
    #allocation3 [shape = 's32[1]{0}', space=sflag, size = 0x4, scoped, tag = 'scoped memory for final_projection.1']
    %8 = vsyncpa [#allocation3], 0
    // Predicated region
    $region2: #{final_projection.1} parent=1 // pred_check
      _
    $region3: #{final_projection.1} parent=1 // pred_check_branch
      %10 = sbr.rel (0) target = $region5
    $region4: #{final_projection.1} parent=1 // pred_region
      _
    $region5: #{final_projection.1} parent=1 // pred_fallthru
      _
    // Predicated region
    $region6: #{final_projection.1} parent=1 // pred_check
      _
    $region7: #{final_projection.1} parent=1 // pred_check_branch
      %12 = sbr.rel (0) target = $region9
    $region8: #{final_projection.1} parent=1 // pred_region
      _
    $region9: #{final_projection.1} parent=1 // pred_fallthru
      _
    // Predicated region
    $region10: #{final_projection.1} parent=1 // pred_check
      _
    $region11: #{final_projection.1} parent=1 // pred_check_branch
      %14 = sbr.rel (0) target = $region13
    $region12: #{final_projection.1} parent=1 // pred_region
      _
    $region13: #{final_projection.1} parent=1 // pred_fallthru
      _
    %v16 = vld [vmem:[%s0] sm:$0xff]
    %v17 = vld [vmem:[%s0 + $0x8] sm:$0xff]
    %v18 = vld [vmem:[%s0 + $0x10] sm:$0xff]
    %v19 = vld [vmem:[%s0 + $0x18] sm:$0xff]
    %v20 = vld [vmem:[%s0 + $0x20] sm:$0xff]
    %v21 = vld [vmem:[%s0 + $0x28] sm:$0xff]
    %v22 = vld [vmem:[%s0 + $0x30] sm:$0xff]
    %v23 = vld [vmem:[%s0 + $0x38] sm:$0xff]
    %v24 = vpack.c.bf16 %v18, %v16
    %v25 = vpack.c.bf16 %v19, %v17
    %v26 = vpack.c.bf16 %v22, %v20
    %v27 = vpack.c.bf16 %v23, %v21
    %v28 = vld [vmem:[%s1] sm:$0xf]
    %v29 = vld [vmem:[%s1 + $0x4] sm:$0xf]
    %v30 = vld [vmem:[%s1 + $0x8] sm:$0xf]
    %v31 = vld [vmem:[%s1 + $0xc] sm:$0xf]
    %v32 = vld [vmem:[%s1 + $0x10] sm:$0xf]
    %v33 = vld [vmem:[%s1 + $0x14] sm:$0xf]
    %v34 = vld [vmem:[%s1 + $0x18] sm:$0xf]
    %v35 = vld [vmem:[%s1 + $0x1c] sm:$0xf]
    %v36 = vld [vmem:[%s1 + $0x20] sm:$0xf]
    %v37 = vld [vmem:[%s1 + $0x24] sm:$0xf]
    %v38 = vld [vmem:[%s1 + $0x28] sm:$0xf]
    %v39 = vld [vmem:[%s1 + $0x2c] sm:$0xf]
    %v40 = vld [vmem:[%s1 + $0x30] sm:$0xf]
    %v41 = vld [vmem:[%s1 + $0x34] sm:$0xf]
    %v42 = vld [vmem:[%s1 + $0x38] sm:$0xf]
    %v43 = vld [vmem:[%s1 + $0x3c] sm:$0xf]
    %v44 = vld [vmem:[%s1 + $0x40] sm:$0xf]
    %v45 = vld [vmem:[%s1 + $0x44] sm:$0xf]
    %v46 = vld [vmem:[%s1 + $0x48] sm:$0xf]
    %v47 = vld [vmem:[%s1 + $0x4c] sm:$0xf]
    %v48 = vld [vmem:[%s1 + $0x50] sm:$0xf]
    %v49 = vld [vmem:[%s1 + $0x54] sm:$0xf]
    %v50 = vld [vmem:[%s1 + $0x58] sm:$0xf]
    %v51 = vld [vmem:[%s1 + $0x5c] sm:$0xf]
    %v52 = vld [vmem:[%s1 + $0x60] sm:$0xf]
    %v53 = vld [vmem:[%s1 + $0x64] sm:$0xf]
    %v54 = vld [vmem:[%s1 + $0x68] sm:$0xf]
    %v55 = vld [vmem:[%s1 + $0x6c] sm:$0xf]
    %v56 = vld [vmem:[%s1 + $0x70] sm:$0xf]
    %v57 = vld [vmem:[%s1 + $0x74] sm:$0xf]
    %v58 = vld [vmem:[%s1 + $0x78] sm:$0xf]
    %v59 = vld [vmem:[%s1 + $0x7c] sm:$0xf]
    %v60 = vld [vmem:[%s2] sm:$0x1]
    %v62 = vlaneseq
    %v63 = vshrl.u32 %v62, 7
    %v64 = vsub.s32 0, %v63
    %v65 = vrot.slane %v60, %v64
    %v99 = vunpack.c.l.b16 %v28
    %v100 = vunpack.c.l.b16 %v29
    %v101 = vunpack.c.l.b16 %v30
    %v102 = vunpack.c.l.b16 %v31
    %v103 = vunpack.c.l.b16 %v32
    %v104 = vunpack.c.l.b16 %v33
    %v105 = vunpack.c.l.b16 %v34
    %v106 = vunpack.c.l.b16 %v35
    %v107 = vunpack.c.l.b16 %v36
    %v108 = vunpack.c.l.b16 %v37
    %v109 = vunpack.c.l.b16 %v38
    %v110 = vunpack.c.l.b16 %v39
    %v111 = vunpack.c.l.b16 %v40
    %v112 = vunpack.c.l.b16 %v41
    %v113 = vunpack.c.l.b16 %v42
    %v114 = vunpack.c.l.b16 %v43
    %v115 = vunpack.c.l.b16 %v44
    %v116 = vunpack.c.l.b16 %v45
    %v117 = vunpack.c.l.b16 %v46
    %v118 = vunpack.c.l.b16 %v47
    %v119 = vunpack.c.l.b16 %v48
    %v120 = vunpack.c.l.b16 %v49
    %v121 = vunpack.c.l.b16 %v50
    %v122 = vunpack.c.l.b16 %v51
    %v123 = vunpack.c.l.b16 %v52
    %v124 = vunpack.c.l.b16 %v53
    %v125 = vunpack.c.l.b16 %v54
    %v126 = vunpack.c.l.b16 %v55
    %v127 = vunpack.c.l.b16 %v56
    %v128 = vunpack.c.l.b16 %v57
    %v129 = vunpack.c.l.b16 %v58
    %v130 = vunpack.c.l.b16 %v59
    %v131 = vpack.c.b16 %v100, %v99
    %v132 = vpack.c.b16 %v102, %v101
    %v133 = vpack.c.b16 %v104, %v103
    %v134 = vpack.c.b16 %v106, %v105
    %v135 = vpack.c.b16 %v108, %v107
    %v136 = vpack.c.b16 %v110, %v109
    %v137 = vpack.c.b16 %v112, %v111
    %v138 = vpack.c.b16 %v114, %v113
    %v139 = vpack.c.b16 %v116, %v115
    %v140 = vpack.c.b16 %v118, %v117
    %v141 = vpack.c.b16 %v120, %v119
    %v142 = vpack.c.b16 %v122, %v121
    %v143 = vpack.c.b16 %v124, %v123
    %v144 = vpack.c.b16 %v126, %v125
    %v145 = vpack.c.b16 %v128, %v127
    %v146 = vpack.c.b16 %v130, %v129
    %163 = vmatprep.subr.bf16.mxu0 0
    %164 = vmatpush1.bf16.msra.mxu0 %v131
    %165 = vmatprep.subr.bf16.mxu0 0
    %166 = vmatpush1.bf16.msra.mxu0 %v132
    %167 = vmatprep.subr.bf16.mxu0 0
    %168 = vmatpush1.bf16.msra.mxu0 %v133
    %169 = vmatprep.subr.bf16.mxu0 0
    %170 = vmatpush1.bf16.msra.mxu0 %v134
    %171 = vmatprep.subr.bf16.mxu0 0
    %172 = vmatpush1.bf16.msra.mxu0 %v135
    %173 = vmatprep.subr.bf16.mxu0 0
    %174 = vmatpush1.bf16.msra.mxu0 %v136
    %175 = vmatprep.subr.bf16.mxu0 0
    %176 = vmatpush1.bf16.msra.mxu0 %v137
    %177 = vmatprep.subr.bf16.mxu0 0
    %178 = vmatpush1.bf16.msra.mxu0 %v138
    %179 = vmatprep.subr.bf16.mxu0 0
    %180 = vmatpush1.bf16.msra.mxu0 %v139
    %181 = vmatprep.subr.bf16.mxu0 0
    %182 = vmatpush1.bf16.msra.mxu0 %v140
    %183 = vmatprep.subr.bf16.mxu0 0
    %184 = vmatpush1.bf16.msra.mxu0 %v141
    %185 = vmatprep.subr.bf16.mxu0 0
    %186 = vmatpush1.bf16.msra.mxu0 %v142
    %187 = vmatprep.subr.bf16.mxu0 0
    %188 = vmatpush1.bf16.msra.mxu0 %v143
    %189 = vmatprep.subr.bf16.mxu0 0
    %190 = vmatpush1.bf16.msra.mxu0 %v144
    %191 = vmatprep.subr.bf16.mxu0 0
    %192 = vmatpush1.bf16.msra.mxu0 %v145
    %193 = vmatprep.subr.bf16.mxu0 0
    %194 = vmatpush1.bf16.msra.mxu0 %v146
    %195 = vmatprep.mubr.bf16.mxu0 %v25
    %196 = vmatmul.mubr.bf16.gmra.mrb[0].mxu0 %v24
    %v197 = vpop.f32.mrb[0].mxu0
    %v198 = vadd.f32 %v65, %v197
    %v199 = vpop.f32.mrb[0].mxu0
    %v200 = vpop.f32.mrb[0].mxu0
    %v201 = vadd.f32 %v65, %v200
    %v202 = vpop.f32.mrb[0].mxu0
    %203 = vmatprep.mubr.bf16.mxu0 %v27
    %204 = vmatmul.mubr.bf16.gmra.mrb[0].mxu0 %v26
    %v205 = vpop.f32.mrb[0].mxu0
    %v206 = vadd.f32 %v65, %v205
    %v207 = vpop.f32.mrb[0].mxu0
    %v208 = vpop.f32.mrb[0].mxu0
    %v209 = vadd.f32 %v65, %v208
    %v210 = vpop.f32.mrb[0].mxu0
    %211 = vdwg.mxu0
    %vm212 = vcmp.gt.f32.partialorder %v198, 0.0
    %vm213 = vcmp.gt.f32.partialorder %v201, 0.0
    %vm214 = vcmp.gt.f32.partialorder %v206, 0.0
    %vm215 = vcmp.gt.f32.partialorder %v209, 0.0
    %v216 = vmul.f32 %v198, 1.442695
    %v217 = vpow.pop %v216
    %v218 = vmul.f32 %v201, 1.442695
    %v219 = vpow.pop %v218
    %v220 = vmul.f32 %v206, 1.442695
    %v221 = vpow.pop %v220
    %v222 = vmul.f32 %v209, 1.442695
    %v223 = vpow.pop %v222
    %v224 = vsub.f32 %v217, 1.0
    %v225 = vsub.f32 %v219, 1.0
    %v226 = vsub.f32 %v221, 1.0
    %v227 = vsub.f32 %v223, 1.0
    %v228 = vmul.f32 %v224, 1.6732632
    %v229 = vmul.f32 %v225, 1.6732632
    %v230 = vmul.f32 %v226, 1.6732632
    %v231 = vmul.f32 %v227, 1.6732632
    %v232 = vsel %vm212, %v198, %v228
    %v233 = vsel %vm213, %v201, %v229
    %v234 = vsel %vm214, %v206, %v230
    %v235 = vsel %vm215, %v209, %v231
    %v236 = vmul.f32 %v232, 1.050701
    %v237 = vmul.f32 %v233, 1.050701
    %v238 = vmul.f32 %v234, 1.050701
    %v239 = vmul.f32 %v235, 1.050701
    %vm240 = vcmask 523264
    %241 = vst.msk [vmem:[#allocation2] sm:$0xff] %vm240, %v236
    %242 = vst.msk [vmem:[#allocation2 + $0x8] sm:$0xff] %vm240, %v237
    %243 = vst.msk [vmem:[#allocation2 + $0x10] sm:$0xff] %vm240, %v238
    %244 = vst.msk [vmem:[#allocation2 + $0x18] sm:$0xff] %vm240, %v239
    // Predicated region
    $region14: #{final_projection.1} parent=1 // pred_check
      _
    $region15: #{final_projection.1} parent=1 // pred_check_branch
      %246 = sbr.rel (0) target = $region17
    $region16: #{final_projection.1} parent=1 // pred_region
      %s248 = ssub.s32 512, 512
      %249 = vsyncadd [#allocation3], %s248
      %s250 = sshll.u32 [#allocation2], 4
      %s251 = int_to_ptr.vmem [resolvable:$true] %s250
      %256 = dma.vmem_to_hbm [thread:$0]  %s251, 512, %s3, [#allocation3], 128, 128, 8
    $region17: #{final_projection.1} parent=1 // pred_fallthru
      _
    // Predicated region
    $region18: #{final_projection.1} parent=1 // pred_check
      _
    $region19: #{final_projection.1} parent=1 // pred_check_branch
      %258 = sbr.rel (0) target = $region21
    $region20: #{final_projection.1} parent=1 // pred_region
      %259 = dma.done [#allocation3], 512
    $region21: #{final_projection.1} parent=1 // pred_fallthru
      _
    %260 = vsyncpa [#allocation3], 1

</llo_original>
